<compile_context>
chip_gen: v7x
topology: tpu7x:2x2x1
jax: 0.10.0
libtpu: 0.0.40
codegen_flags: <defaults>
</compile_context>

<pallas_src>
import jax
import jax.numpy as jnp
from jax.experimental import pallas as pl
from jax.experimental.pallas import tpu as pltpu


def _denorm_kernel(x_ref, scale_ref, bias_ref, o_ref):
    # x_ref / o_ref: (bR, bL) lane-dense tile.
    # scale_ref / bias_ref: (bR, 1) per-row affine coefficients (f32),
    # broadcast across the lane dimension by the VPU.
    x = x_ref[...].astype(jnp.float32)
    o_ref[...] = (x * scale_ref[...] + bias_ref[...]).astype(o_ref.dtype)


def _pick_blocks(R, L, itemsize, budget_bytes=3 * 1024 * 1024, row_cap=1024):
    """Choose (bR, bL) from a per-buffer VMEM byte budget.

    - Row block alignment is dtype-aware (min packed sublane tile).
    - Lane block is the largest multiple of 128 that fits the budget; if the
      lane axis must be split, prefer a block that exactly divides L so the
      last column block is not partial.
    - Full-extent blocks are always legal regardless of alignment.
    """
    if itemsize >= 4:
        row_align = 8
    elif itemsize == 2:
        row_align = 16
    else:
        row_align = 32

    # Row block: full extent if small (typical: R = N*C is tiny), else an
    # aligned cap; the ragged row tail (if any) is handled by Pallas masking.
    if R <= row_cap:
        bR = R
    else:
        bR = max(row_align, (row_cap // row_align) * row_align)

    # Lane block from the VMEM budget.
    if L * bR * itemsize <= budget_bytes:
        bL = L  # full extent: always a legal block shape
    else:
        max_bL = max(128, ((budget_bytes // (bR * itemsize)) // 128) * 128)
        bL = None
        if L % 128 == 0:
            # Prefer the largest multiple of 128 <= max_bL that divides L.
            cand = max_bL
            while cand >= 128:
                if L % cand == 0:
                    bL = cand
                    break
                cand -= 128
        if bL is None:
            bL = max_bL
    return bR, bL


def denormalize(x, mean, std):
    """x: (N, C, H, W); mean, std: length-C sequences/arrays. Returns x*std+mean."""
    N, C, H, W = x.shape
    R, L = N * C, H * W
    itemsize = jnp.dtype(x.dtype).itemsize

    mean32 = jnp.asarray(mean, jnp.float32).reshape(C)
    std32 = jnp.asarray(std, jnp.float32).reshape(C)

    # Per-row (= per (n, c) image plane) scale / bias, kept in f32.
    scale_rows = jnp.tile(std32, N).reshape(R, 1)
    bias_rows = jnp.tile(mean32, N).reshape(R, 1)

    # Lane-dense 2D view of the input.
    x2d = x.reshape(R, L)

    bR, bL = _pick_blocks(R, L, itemsize)
    grid = (pl.cdiv(R, bR), pl.cdiv(L, bL))

    cost = pl.CostEstimate(
        flops=2 * R * L,
        transcendentals=0,
        bytes_accessed=2 * R * L * itemsize + 2 * R * 4,
    )

    out2d = pl.pallas_call(
        _denorm_kernel,
        out_shape=jax.ShapeDtypeStruct((R, L), x.dtype),
        grid_spec=pltpu.PrefetchScalarGridSpec(
            num_scalar_prefetch=0,
            grid=grid,
            in_specs=[
                pl.BlockSpec((bR, bL), lambda i, j: (i, j)),
                # scale/bias block index is constant across the inner (column)
                # axis, so their DMA only fires when the row block changes.
                pl.BlockSpec((bR, 1), lambda i, j: (i, 0)),
                pl.BlockSpec((bR, 1), lambda i, j: (i, 0)),
            ],
            out_specs=pl.BlockSpec((bR, bL), lambda i, j: (i, j)),
        ),
        compiler_params=pltpu.CompilerParams(
            # Every (i, j) block is independent (no accumulator): both axes
            # parallel so v7x can shard the column axis across its 2 TCs.
            dimension_semantics=("parallel", "parallel"),
        ),
        cost_estimate=cost,
    )(x2d, scale_rows, bias_rows)

    return out2d.reshape(N, C, H, W)


if __name__ == "__main__":
    key = jax.random.PRNGKey(0)
    N, C, H, W = 2, 3, 16, 16

    # ImageNet-style normalization constants (typical DINOv2 preprocessing).
    mean = (0.485, 0.456, 0.406)
    std = (0.229, 0.224, 0.225)

    x = jax.random.normal(key, (N, C, H, W), dtype=jnp.float32)

    out = denormalize(x, mean, std)
    out = jax.block_until_ready(out)

    # Reference (plain JAX, mirrors the PyTorch broadcast semantics).
    ref = x * jnp.asarray(std, jnp.float32).reshape(1, C, 1, 1) + \
        jnp.asarray(mean, jnp.float32).reshape(1, C, 1, 1)

    assert out.shape == (N, C, H, W)
    assert out.dtype == jnp.float32
    assert jnp.allclose(out, ref, atol=1e-6, rtol=1e-6)

    print("KERNEL_OK")
</pallas_src>

<mosaic_0001>
module attributes {stable_mosaic.version = 11 : i64} {
  func.func @_denorm_kernel(%arg0: i32, %arg1: i32, %arg2: memref<6x256xf32, #tpu.memory_space<vmem>>, %arg3: memref<6x1xf32, #tpu.memory_space<vmem>>, %arg4: memref<6x1xf32, #tpu.memory_space<vmem>>, %arg5: memref<6x256xf32, #tpu.memory_space<vmem>>) attributes {dimension_semantics = [#tpu.dimension_semantics<parallel>, #tpu.dimension_semantics<parallel>], iteration_bounds = array<i64: 1, 1>, scalar_prefetch = 0 : i64, scratch_operands = 0 : i64, tpu.core_type = #tpu.core_type<tc>, window_params = [{transform_indices = @transform_0, window_bounds = array<i64: 6, 256>}, {transform_indices = @transform_1, window_bounds = array<i64: 6, 1>}, {transform_indices = @transform_2, window_bounds = array<i64: 6, 1>}, {transform_indices = @transform_3, window_bounds = array<i64: 6, 256>}]} {
    %c0 = arith.constant 0 : index
    %c0_0 = arith.constant 0 : index
    %0 = vector.load %arg2[%c0, %c0_0] : memref<6x256xf32, #tpu.memory_space<vmem>>, vector<6x256xf32>
    %c0_1 = arith.constant 0 : index
    %c0_2 = arith.constant 0 : index
    %1 = vector.load %arg3[%c0_1, %c0_2] : memref<6x1xf32, #tpu.memory_space<vmem>>, vector<6x1xf32>
    %2 = vector.broadcast %1 : vector<6x1xf32> to vector<6x256xf32>
    %3 = arith.mulf %0, %2 : vector<6x256xf32>
    %c0_3 = arith.constant 0 : index
    %c0_4 = arith.constant 0 : index
    %4 = vector.load %arg4[%c0_3, %c0_4] : memref<6x1xf32, #tpu.memory_space<vmem>>, vector<6x1xf32>
    %5 = vector.broadcast %4 : vector<6x1xf32> to vector<6x256xf32>
    %6 = arith.addf %3, %5 : vector<6x256xf32>
    %c0_5 = arith.constant 0 : index
    %c0_6 = arith.constant 0 : index
    %7 = vector.load %arg5[%c0_5, %c0_6] : memref<6x256xf32, #tpu.memory_space<vmem>>, vector<6x256xf32>
    tpu.vector_store %arg5[%c0_5, %c0_6], %6 {strides = array<i32>} : memref<6x256xf32, #tpu.memory_space<vmem>>, vector<6x256xf32>,
    return
  }
  func.func @transform_0(%arg0: i32, %arg1: i32) -> (i32, i32) {
    %c0_i32 = arith.constant 0 : i32
    return %arg0, %arg1 : i32, i32
  }
  func.func @transform_1(%arg0: i32, %arg1: i32) -> (i32, i32) {
    %c0_i32 = arith.constant 0 : i32
    %c0_i32_0 = arith.constant 0 : i32
    return %arg0, %c0_i32 : i32, i32
  }
  func.func @transform_2(%arg0: i32, %arg1: i32) -> (i32, i32) {
    %c0_i32 = arith.constant 0 : i32
    %c0_i32_0 = arith.constant 0 : i32
    return %arg0, %c0_i32 : i32, i32
  }
  func.func @transform_3(%arg0: i32, %arg1: i32) -> (i32, i32) {
    %c0_i32 = arith.constant 0 : i32
    return %arg0, %arg1 : i32, i32
  }
}

</mosaic_0001>

<llo_original>
// kernel: tpu_custom_call.1
$region0: #{tpu_custom_call.1}
  #allocation0 [shape = 'u32[]', space=smem, size = 0x4, offset = 0x4, fixed_abs, tag = 'smem constant byte address 0x4 - core index']
  #allocation1 [shape = 'u32[144,128]{1,0:T(1,128)}', space=vmem, size = 0x12000, scoped, tag = 'internal scratch']
  %s0 = inlined_call_operand.vmem [shape: f32[6,256], index: 0, kind: input, shape index: {}]
  %s1 = inlined_call_operand.vmem [shape: f32[6,1], index: 1, kind: input, shape index: {}]
  %s2 = inlined_call_operand.vmem [shape: f32[6,1], index: 2, kind: input, shape index: {}]
  %s3 = inlined_call_operand.hbm [shape: f32[6,256], index: 3, kind: output, shape index: {}]
  %s4 = sld [smem:[#allocation0]]
  $region22: #{tpu_custom_call.1} parent=0
    _
  %s6 = ssub.s32 1, %s4
  %s7 = scalar_select 0, %s6, %s4
  $region1: #{tpu_custom_call.1} parent=0
    #allocation2 [shape = 'u8[8192]{0}', space=vmem, size = 0x2000, scoped, tag = 'output window, operand 0, single buffered']
    #allocation3 [shape = 's32[1]{0}', space=sflag, size = 0x4, scoped, tag = 'scoped memory for tpu_custom_call.1']
    %8 = vsyncpa [#allocation3], 0
    // Predicated region
    $region2: #{tpu_custom_call.1} parent=1 // pred_check
      _
    $region3: #{tpu_custom_call.1} parent=1 // pred_check_branch
      %10 = sbr.rel (0) target = $region5
    $region4: #{tpu_custom_call.1} parent=1 // pred_region
      _
    $region5: #{tpu_custom_call.1} parent=1 // pred_fallthru
      _
    // Predicated region
    $region6: #{tpu_custom_call.1} parent=1 // pred_check
      _
    $region7: #{tpu_custom_call.1} parent=1 // pred_check_branch
      %12 = sbr.rel (0) target = $region9
    $region8: #{tpu_custom_call.1} parent=1 // pred_region
      _
    $region9: #{tpu_custom_call.1} parent=1 // pred_fallthru
      _
    // Predicated region
    $region10: #{tpu_custom_call.1} parent=1 // pred_check
      _
    $region11: #{tpu_custom_call.1} parent=1 // pred_check_branch
      %14 = sbr.rel (0) target = $region13
    $region12: #{tpu_custom_call.1} parent=1 // pred_region
      _
    $region13: #{tpu_custom_call.1} parent=1 // pred_fallthru
      _
    %v15 = vld [vmem:[%s0] sm:$0x3f]
    %v16 = vld [vmem:[%s0 + $0x8] sm:$0x3f]
    %v17 = vld [vmem:[%s1] sm:$0x3f]
    %19 = vset.pattern.permute.xlu0 0
    %20 = vperm.xlu0 %19, %v17
    %v21 = vpop.permute.xlu0 %20
    %v23 = vmul.f32 %v15, %v21
    %v24 = vmul.f32 %v16, %v21
    %v25 = vld [vmem:[%s2] sm:$0x3f]
    %27 = vset.pattern.permute.xlu0 0
    %28 = vperm.xlu0 %27, %v25
    %v29 = vpop.permute.xlu0 %28
    %v31 = vadd.f32 %v23, %v29
    %v32 = vadd.f32 %v24, %v29
    %33 = vst [vmem:[#allocation2] sm:$0x3f] %v31
    %34 = vst [vmem:[#allocation2 + $0x8] sm:$0x3f] %v32
    // Predicated region
    $region14: #{tpu_custom_call.1} parent=1 // pred_check
      _
    $region15: #{tpu_custom_call.1} parent=1 // pred_check_branch
      %36 = sbr.rel (0) target = $region17
    $region16: #{tpu_custom_call.1} parent=1 // pred_region
      %s38 = ssub.s32 256, 256
      %39 = vsyncadd [#allocation3], %s38
      %s41 = sshll.u32 [#allocation2], 4
      %s42 = int_to_ptr.vmem [resolvable:$true] %s41
      %44 = dma.vmem_to_hbm [thread:$0]  %s42, 256, %s3, [#allocation3]
    $region17: #{tpu_custom_call.1} parent=1 // pred_fallthru
      _
    // Predicated region
    $region18: #{tpu_custom_call.1} parent=1 // pred_check
      _
    $region19: #{tpu_custom_call.1} parent=1 // pred_check_branch
      %46 = sbr.rel (0) target = $region21
    $region20: #{tpu_custom_call.1} parent=1 // pred_region
      %47 = dma.done [#allocation3], 256
    $region21: #{tpu_custom_call.1} parent=1 // pred_fallthru
      _
    %48 = vsyncpa [#allocation3], 1

</llo_original>
